<compile_context>
chip_gen: v7x
topology: tpu7x:2x2x1
jax: 0.10.0
libtpu: 0.0.40
codegen_flags: <defaults>
</compile_context>

<pallas_src>
import functools

import jax
import jax.numpy as jnp
from jax.experimental import pallas as pl
from jax.experimental.pallas import tpu as pltpu


def contrast_loss_kernel(lcol_ref, lrow_ref, rhs_ref, x_ref, sq_ref, o_ref,
                         *, margin, batch, tm, d):
    # lcol_ref: (tm, 1)  int32  labels for this row tile (pipelined)
    # lrow_ref: (1, B)   int32  all labels, resident once (memory_space=VMEM)
    # rhs_ref:  (B, Dp)  bf16   fused RHS [x | ||x||^2 | 1 | 0-pad], resident once
    # x_ref:    (tm, D)  f32    embeddings for this row tile (pipelined)
    # sq_ref:   (tm, 1)  f32    exact squared norms for this row tile
    # o_ref:    (1, 128) f32    this tile's partial sum, replicated across lanes
    i = pl.program_id(0)
    r0 = i * tm

    lc = lcol_ref[...]                                   # (tm, 1)
    lr = lrow_ref[...]                                   # (1, B)

    # Same-class mask for this row tile, diagonal excluded (keeps isolated-class
    # rows at s2 == 0 bit-exactly).  0/1 values are exact in bf16.
    row_ids = r0 + jax.lax.broadcasted_iota(jnp.int32, (tm, batch), 0)
    col_ids = jax.lax.broadcasted_iota(jnp.int32, (tm, batch), 1)
    keep = (lc == lr) & (row_ids != col_ids)
    mask = jnp.where(keep, 1.0, 0.0).astype(jnp.bfloat16)           # (tm, B)

    # One fused bf16 MXU contraction:  mask @ [x | sq | 1 | pad] -> [m | msq | n | *]
    res = jnp.dot(mask, rhs_ref[...], preferred_element_type=jnp.float32)  # (tm, Dp)
    m = res[:, :d]                                                   # (tm, D)
    msq = res[:, d:d + 1]                                            # (tm, 1)
    n = res[:, d + 1:d + 2]                                          # (tm, 1)

    # s2_i = sum_{j same class, j != i} ||x_j - x_i||^2
    #      = n * ||x_i||^2 + sum_j ||x_j||^2 - 2 * x_i . sum_j x_j
    x_tile = x_ref[...]                                              # (tm, D) f32
    xm = jnp.sum(x_tile * m, axis=-1, keepdims=True)                 # (tm, 1)
    s2 = n * sq_ref[...] + msq - 2.0 * xm                            # (tm, 1)

    s = jnp.sqrt(jnp.maximum(s2, 0.0))        # Frobenius norm per row
    # dist_other == dist_same because of the bug in the reference module.
    hinge = jnp.maximum(margin - s, 0.0)
    per_sample = s + hinge * hinge                                   # (tm, 1)

    partial = jnp.sum(per_sample, axis=(0, 1), keepdims=True)        # (1, 1)
    o_ref[...] = jnp.broadcast_to(partial, (1, 128))   # lane-dense, unmasked store


def _round_up(x, m):
    return (x + m - 1) // m * m


def _row_tile(batch, live_bytes_per_row):
    """Row tile: multiple of 8 dividing B, bounded so the live per-tile
    intermediates (bf16 mask row + f32 fused-matmul row) stay <= ~512 KiB."""
    if batch % 8 != 0:
        return batch                     # tiny / odd batch: single tile (grid = 1)
    budget = 512 * 1024
    for t in (512, 256, 128, 64, 32, 16, 8):
        if batch % t == 0 and t * live_bytes_per_row <= budget:
            return t
    return 8


def contrast_loss(out, labels, margin=0.1):
    """Pallas equivalent of ConstrastLoss.forward(out, labels)."""
    if out.dtype != jnp.float32:
        out = out.astype(jnp.float32)
    B, D = out.shape
    Dp = _round_up(D + 2, 128)           # fused RHS width (256 for D=128)

    # Mean-centering is distance-invariant and keeps the expanded-norm form
    # well conditioned (needed before moving the MXU operands to bf16).
    x = out - jnp.mean(out, axis=0, keepdims=True)
    sq = jnp.sum(x * x, axis=-1, keepdims=True)                      # (B,1), once
    pad = Dp - D - 2
    rhs_cols = [x, sq, jnp.ones((B, 1), jnp.float32)]
    if pad:
        rhs_cols.append(jnp.zeros((B, pad), jnp.float32))
    rhs = jnp.concatenate(rhs_cols, axis=1).astype(jnp.bfloat16)     # (B, Dp) bf16

    labels = labels.astype(jnp.int32)
    lcol = labels.reshape(B, 1)          # tiny int32 views — no O(B^2) host op / DMA
    lrow = labels.reshape(1, B)

    # Live per-row bytes inside the kernel (bf16 mask row + f32 matmul-out row
    # + f32 m / x rows) — bounds the row tile to avoid vreg spill.
    live_per_row = 2 * B + 4 * Dp + 8 * D
    tm = _row_tile(B, live_per_row)
    G = B // tm

    # Explicit VMEM budget: single-buffered residents + double-buffered row
    # tiles + in-flight intermediates, with headroom.
    resident = B * Dp * 2 + 8 * _round_up(B, 128) * 4
    tiles = 2 * (tm * D * 4 + 2 * tm * 128 * 4) + 2 * 8 * 128 * 4
    vmem_limit = int(min(max(resident + tiles + tm * live_per_row + (4 << 20),
                             8 << 20), 120 << 20))

    kernel = functools.partial(contrast_loss_kernel, margin=float(margin),
                               batch=B, tm=tm, d=D)

    res = pl.pallas_call(
        kernel,
        out_shape=jax.ShapeDtypeStruct((1, 128 * G), jnp.float32),
        grid=(G,),
        in_specs=[
            pl.BlockSpec((tm, 1), lambda i: (i, 0)),             # labels (column tile)
            pl.BlockSpec(memory_space=pltpu.MemorySpace.VMEM),   # labels (row), resident 1x
            pl.BlockSpec(memory_space=pltpu.MemorySpace.VMEM),   # fused bf16 RHS, resident 1x
            pl.BlockSpec((tm, D), lambda i: (i, 0)),             # x row tile (f32)
            pl.BlockSpec((tm, 1), lambda i: (i, 0)),             # ||x||^2 row tile (f32)
        ],
        out_specs=pl.BlockSpec((1, 128), lambda i: (0, i)),
        compiler_params=pltpu.CompilerParams(
            # No shared accumulator across tiles -> row axis is parallel
            # (uses both TensorCores on v7x; no-op on single-TC v5e/v6e).
            dimension_semantics=("parallel",),
            vmem_limit_bytes=vmem_limit),
        cost_estimate=pl.CostEstimate(
            flops=2 * B * B * Dp + 4 * B * D,
            transcendentals=B,
            bytes_accessed=B * Dp * 2 + B * D * 4 + B * 12 + G * 512),
    )(lcol, lrow, rhs, x, sq)

    # Each tile's partial is replicated across its 128 output lanes; take lane 0.
    return jnp.sum(res.reshape(G, 128)[:, 0]) / jnp.float32(B)


def contrast_loss_ref(out, labels, margin=0.1):
    """Pure-JAX reimplementation of the PyTorch loop (including its bug)."""
    B = out.shape[0]
    val = jnp.float32(0.0)
    for i in range(B):
        same = labels == labels[i]
        diff = jnp.where(same[:, None], out - out[i], 0.0)
        dist_same = jnp.sqrt(jnp.sum(diff * diff))
        dist_other = dist_same  # bug: squeezes embedding_same_class
        val = val + dist_same
        om = jnp.maximum(margin - dist_other, 0.0)
        val = val + om * om
    return val / B


if __name__ == "__main__":
    key = jax.random.PRNGKey(0)
    B, D = 8, 128
    out = 0.05 * jax.random.normal(key, (B, D), dtype=jnp.float32)
    # One sample (label 3) is alone in its class -> exercises the hinge branch
    # and the exact-zero isolated-sample path.
    labels = jnp.array([0, 0, 1, 1, 2, 2, 0, 3], dtype=jnp.int32)

    loss = contrast_loss(out, labels, margin=0.1)
    loss = jax.block_until_ready(loss)

    ref = contrast_loss_ref(out, labels, margin=0.1)
    # bf16 MXU operands -> widened tolerance (mask/counts stay exact; x does not).
    assert jnp.allclose(loss, ref, rtol=1e-2, atol=1e-3), (loss, ref)

    print("KERNEL_OK")
</pallas_src>

<mosaic_0001>
module attributes {stable_mosaic.version = 11 : i64} {
  func.func @contrast_loss_kernel(%arg0: i32, %arg1: memref<8x1xi32, #tpu.memory_space<vmem>>, %arg2: memref<1x8xi32, #tpu.memory_space<vmem>>, %arg3: memref<8x256xbf16, #tpu.memory_space<vmem>>, %arg4: memref<8x128xf32, #tpu.memory_space<vmem>>, %arg5: memref<8x1xf32, #tpu.memory_space<vmem>>, %arg6: memref<1x128xf32, #tpu.memory_space<vmem>>) attributes {dimension_semantics = [#tpu.dimension_semantics<parallel>], iteration_bounds = array<i64: 1>, scalar_prefetch = 0 : i64, scratch_operands = 0 : i64, tpu.core_type = #tpu.core_type<tc>, window_params = [{transform_indices = @transform_0, window_bounds = array<i64: 8, 1>}, {pipeline_mode = #tpu.pipeline_mode<synchronous>, transform_indices = @transform_1, window_bounds = array<i64: 1, 8>}, {pipeline_mode = #tpu.pipeline_mode<synchronous>, transform_indices = @transform_2, window_bounds = array<i64: 8, 256>}, {transform_indices = @transform_3, window_bounds = array<i64: 8, 128>}, {transform_indices = @transform_4, window_bounds = array<i64: 8, 1>}, {transform_indices = @transform_5, window_bounds = array<i64: 1, 128>}]} {
    %c8_i32 = arith.constant 8 : i32
    %0 = arith.muli %arg0, %c8_i32 : i32
    %c0 = arith.constant 0 : index
    %c0_0 = arith.constant 0 : index
    %1 = vector.load %arg1[%c0, %c0_0] : memref<8x1xi32, #tpu.memory_space<vmem>>, vector<8x1xi32>
    %c0_1 = arith.constant 0 : index
    %c0_2 = arith.constant 0 : index
    %2 = vector.load %arg2[%c0_1, %c0_2] : memref<1x8xi32, #tpu.memory_space<vmem>>, vector<1x8xi32>
    %3 = tpu.iota {dimensions = array<i32: 0>} : vector<8x8xi32>
    %4 = vector.broadcast %0 : i32 to vector<8x8xi32>
    %5 = arith.addi %4, %3 : vector<8x8xi32>
    %6 = tpu.iota {dimensions = array<i32: 1>} : vector<8x8xi32>
    %7 = vector.broadcast %1 : vector<8x1xi32> to vector<8x8xi32>
    %8 = vector.broadcast %2 : vector<1x8xi32> to vector<8x8xi32>
    %9 = arith.cmpi eq, %7, %8 : vector<8x8xi32>
    %10 = arith.cmpi ne, %5, %6 : vector<8x8xi32>
    %11 = arith.andi %9, %10 : vector<8x8xi1>
    %cst = arith.constant 1.000000e+00 : f32
    %cst_3 = arith.constant 0.000000e+00 : f32
    %12 = vector.broadcast %cst : f32 to vector<8x8xf32>
    %13 = vector.broadcast %cst_3 : f32 to vector<8x8xf32>
    %14 = arith.select %11, %12, %13 : vector<8x8xi1>, vector<8x8xf32>
    %15 = arith.truncf %14 : vector<8x8xf32> to vector<8x8xbf16>
    %c0_4 = arith.constant 0 : index
    %c0_5 = arith.constant 0 : index
    %16 = vector.load %arg3[%c0_4, %c0_5] : memref<8x256xbf16, #tpu.memory_space<vmem>>, vector<8x256xbf16>
    %cst_6 = arith.constant dense<0.000000e+00> : vector<8x256xf32>
    %17 = tpu.matmul %15, %16, %cst_6 {dimension_numbers = #tpu.dot_dimension_numbers<[1], [0], [0], [1], [0, 0, 1, 1], [], []>} : vector<8x8xbf16>, vector<8x256xbf16>, vector<8x256xf32> -> vector<8x256xf32>
    %18 = vector.extract_strided_slice %17 {offsets = [0, 0], sizes = [8, 128], strides = [1, 1]} : vector<8x256xf32> to vector<8x128xf32>
    %19 = vector.extract_strided_slice %17 {offsets = [0, 128], sizes = [8, 1], strides = [1, 1]} : vector<8x256xf32> to vector<8x1xf32>
    %20 = vector.extract_strided_slice %17 {offsets = [0, 129], sizes = [8, 1], strides = [1, 1]} : vector<8x256xf32> to vector<8x1xf32>
    %c0_7 = arith.constant 0 : index
    %c0_8 = arith.constant 0 : index
    %21 = vector.load %arg4[%c0_7, %c0_8] : memref<8x128xf32, #tpu.memory_space<vmem>>, vector<8x128xf32>
    %22 = arith.mulf %21, %18 : vector<8x128xf32>
    %cst_9 = arith.constant dense<0.000000e+00> : vector<8xf32>
    %23 = vector.multi_reduction <add>, %22, %cst_9 [1] : vector<8x128xf32> to vector<8xf32>
    %24 = vector.shape_cast %23 : vector<8xf32> to vector<8x1xf32>
    %c0_10 = arith.constant 0 : index
    %c0_11 = arith.constant 0 : index
    %25 = vector.load %arg5[%c0_10, %c0_11] : memref<8x1xf32, #tpu.memory_space<vmem>>, vector<8x1xf32>
    %26 = arith.mulf %20, %25 : vector<8x1xf32>
    %27 = arith.addf %26, %19 : vector<8x1xf32>
    %cst_12 = arith.constant 2.000000e+00 : f32
    %28 = vector.broadcast %cst_12 : f32 to vector<8x1xf32>
    %29 = arith.mulf %28, %24 : vector<8x1xf32>
    %30 = arith.subf %27, %29 : vector<8x1xf32>
    %cst_13 = arith.constant 0.000000e+00 : f32
    %31 = vector.broadcast %cst_13 : f32 to vector<8x1xf32>
    %32 = arith.maximumf %30, %31 : vector<8x1xf32>
    %33 = math.sqrt %32 : vector<8x1xf32>
    %cst_14 = arith.constant 1.000000e-01 : f32
    %34 = vector.broadcast %cst_14 : f32 to vector<8x1xf32>
    %35 = arith.subf %34, %33 : vector<8x1xf32>
    %cst_15 = arith.constant 0.000000e+00 : f32
    %36 = vector.broadcast %cst_15 : f32 to vector<8x1xf32>
    %37 = arith.maximumf %35, %36 : vector<8x1xf32>
    %38 = arith.mulf %37, %37 : vector<8x1xf32>
    %39 = arith.addf %33, %38 : vector<8x1xf32>
    %40 = vector.shape_cast %39 : vector<8x1xf32> to vector<1x8x1xf32>
    %cst_16 = arith.constant dense<0.000000e+00> : vector<1xf32>
    %41 = vector.multi_reduction <add>, %40, %cst_16 [1, 2] : vector<1x8x1xf32> to vector<1xf32>
    %42 = vector.shape_cast %41 : vector<1xf32> to vector<1x1x1xf32>
    %43 = vector.extract %42[0, 0, 0] : f32 from vector<1x1x1xf32>
    %44 = vector.broadcast %43 : f32 to vector<1x1xf32>
    %45 = vector.shape_cast %44 : vector<1x1xf32> to vector<1x1xf32>
    %46 = vector.broadcast %45 : vector<1x1xf32> to vector<1x128xf32>
    %c0_17 = arith.constant 0 : index
    %c0_18 = arith.constant 0 : index
    %47 = vector.load %arg6[%c0_17, %c0_18] : memref<1x128xf32, #tpu.memory_space<vmem>>, vector<1x128xf32>
    tpu.vector_store %arg6[%c0_17, %c0_18], %46 {strides = array<i32>} : memref<1x128xf32, #tpu.memory_space<vmem>>, vector<1x128xf32>,
    return
  }
  func.func @transform_0(%arg0: i32) -> (i32, i32) {
    %c0_i32 = arith.constant 0 : i32
    %c0_i32_0 = arith.constant 0 : i32
    return %arg0, %c0_i32 : i32, i32
  }
  func.func @transform_1(%arg0: i32) -> (i32, i32) {
    %c0_i32 = arith.constant 0 : i32
    %c0_i32_0 = arith.constant 0 : i32
    %c0_i32_1 = arith.constant 0 : i32
    return %c0_i32, %c0_i32_0 : i32, i32
  }
  func.func @transform_2(%arg0: i32) -> (i32, i32) {
    %c0_i32 = arith.constant 0 : i32
    %c0_i32_0 = arith.constant 0 : i32
    %c0_i32_1 = arith.constant 0 : i32
    return %c0_i32, %c0_i32_0 : i32, i32
  }
  func.func @transform_3(%arg0: i32) -> (i32, i32) {
    %c0_i32 = arith.constant 0 : i32
    %c0_i32_0 = arith.constant 0 : i32
    return %arg0, %c0_i32 : i32, i32
  }
  func.func @transform_4(%arg0: i32) -> (i32, i32) {
    %c0_i32 = arith.constant 0 : i32
    %c0_i32_0 = arith.constant 0 : i32
    return %arg0, %c0_i32 : i32, i32
  }
  func.func @transform_5(%arg0: i32) -> (i32, i32) {
    %c0_i32 = arith.constant 0 : i32
    %c0_i32_0 = arith.constant 0 : i32
    return %c0_i32, %arg0 : i32, i32
  }
}

</mosaic_0001>

<llo_original>
// kernel: tpu_custom_call.1
$region0: #{tpu_custom_call.1}
  #allocation0 [shape = 'u32[]', space=smem, size = 0x4, offset = 0x4, fixed_abs, tag = 'smem constant byte address 0x4 - core index']
  #allocation1 [shape = 'u32[144,128]{1,0:T(1,128)}', space=vmem, size = 0x12000, scoped, tag = 'internal scratch']
  %s0 = inlined_call_operand.vmem [shape: s32[8,1], index: 0, kind: input, shape index: {}]
  %s1 = inlined_call_operand.vmem [shape: s32[1,8], index: 1, kind: input, shape index: {}]
  %s2 = inlined_call_operand.vmem [shape: bf16[8,256], index: 2, kind: input, shape index: {}]
  %s3 = inlined_call_operand.vmem [shape: f32[8,128], index: 3, kind: input, shape index: {}]
  %s4 = inlined_call_operand.vmem [shape: f32[8,1], index: 4, kind: input, shape index: {}]
  %s5 = inlined_call_operand.hbm [shape: f32[1,128], index: 5, kind: output, shape index: {}]
  %s6 = sld [smem:[#allocation0]]
  $region30: #{tpu_custom_call.1} parent=0
    _
  %s8 = ssub.s32 1, %s6
  %s9 = scalar_select 0, %s8, %s6
  $region1: #{tpu_custom_call.1} parent=0
    #allocation2 [shape = 'u8[512]{0}', space=vmem, size = 0x400, scoped, tag = 'output window, operand 0, single buffered']
    #allocation3 [shape = 's32[1]{0}', space=sflag, size = 0x4, scoped, tag = 'scoped memory for tpu_custom_call.1']
    %10 = vsyncpa [#allocation3], 0
    // Predicated region
    $region2: #{tpu_custom_call.1} parent=1 // pred_check
      _
    $region3: #{tpu_custom_call.1} parent=1 // pred_check_branch
      %12 = sbr.rel (0) target = $region5
    $region4: #{tpu_custom_call.1} parent=1 // pred_region
      _
    $region5: #{tpu_custom_call.1} parent=1 // pred_fallthru
      _
    // Predicated region
    $region6: #{tpu_custom_call.1} parent=1 // pred_check
      _
    $region7: #{tpu_custom_call.1} parent=1 // pred_check_branch
      %14 = sbr.rel (0) target = $region9
    $region8: #{tpu_custom_call.1} parent=1 // pred_region
      _
    $region9: #{tpu_custom_call.1} parent=1 // pred_fallthru
      _
    // Predicated region
    $region10: #{tpu_custom_call.1} parent=1 // pred_check
      _
    $region11: #{tpu_custom_call.1} parent=1 // pred_check_branch
      %16 = sbr.rel (0) target = $region13
    $region12: #{tpu_custom_call.1} parent=1 // pred_region
      _
    $region13: #{tpu_custom_call.1} parent=1 // pred_fallthru
      _
    // Predicated region
    $region14: #{tpu_custom_call.1} parent=1 // pred_check
      _
    $region15: #{tpu_custom_call.1} parent=1 // pred_check_branch
      %18 = sbr.rel (0) target = $region17
    $region16: #{tpu_custom_call.1} parent=1 // pred_region
      _
    $region17: #{tpu_custom_call.1} parent=1 // pred_fallthru
      _
    // Predicated region
    $region18: #{tpu_custom_call.1} parent=1 // pred_check
      _
    $region19: #{tpu_custom_call.1} parent=1 // pred_check_branch
      %20 = sbr.rel (0) target = $region21
    $region20: #{tpu_custom_call.1} parent=1 // pred_region
      _
    $region21: #{tpu_custom_call.1} parent=1 // pred_fallthru
      _
    %s22 = smul.u32 0, 8
    %v23 = vld [vmem:[%s0] sm:$0xff]
    %v24 = vld [vmem:[%s1] sm:$0x1]
    %v25 = vlaneseq
    %v26 = vshrl.u32 %v25, 7
    %v27 = vstv %s22
    %v28 = vadd.s32 %v27, %v26
    %v29 = vlaneseq
    %v30 = vand.u32 %v29, 127
    %31 = vset.pattern.permute.xlu0 0
    %32 = vperm.xlu0 %31, %v23
    %v33 = vpop.permute.xlu0 %32
    %v34 = vlaneseq
    %v35 = vshrl.u32 %v34, 7
    %v36 = vsub.s32 0, %v35
    %v37 = vrot.slane %v24, %v36
    %vm38 = vcmp.eq.s32.totalorder %v33, %v37
    %vm39 = vcmp.ne.s32.totalorder %v28, %v30
    %vm40 = vmand %vm38, %vm39
    %v41 = vsel %vm40, 1.0, 0.0
    %v42 = vpack.c.bf16 %v41, %v41
    %v43 = vld [vmem:[%s2] sm:$0xff]
    %v45 = vunpack.c.l.b16 %v43
    %v46 = vunpack.c.h.b16 %v43
    %v47 = vpack.c.b16 %v45, %v45
    %v48 = vpack.c.b16 %v46, %v46
    %vm49 = vcmask 64512
    %v51 = vsel %vm49, %v42, 0
    %vm53 = vcmask 1043456
    %v55 = vsel %vm53, %v47, 0
    %v58 = vsel %vm53, %v48, 0
    %60 = vmatprep.subr.bf16.mxu0 %v58
    %61 = vmatpush1.bf16.msra.mxu0 %v55
    %62 = vmatprep.subr.bf16.mxu0 0
    %63 = vmatpush1.bf16.msra.mxu0 0
    %64 = vmatprep.subr.bf16.mxu0 0
    %65 = vmatpush1.bf16.msra.mxu0 0
    %66 = vmatprep.subr.bf16.mxu0 0
    %67 = vmatpush1.bf16.msra.mxu0 0
    %68 = vmatprep.subr.bf16.mxu0 0
    %69 = vmatpush1.bf16.msra.mxu0 0
    %70 = vmatprep.subr.bf16.mxu0 0
    %71 = vmatpush1.bf16.msra.mxu0 0
    %72 = vmatprep.subr.bf16.mxu0 0
    %73 = vmatpush1.bf16.msra.mxu0 0
    %74 = vmatprep.subr.bf16.mxu0 0
    %75 = vmatpush1.bf16.msra.mxu0 0
    %76 = vmatprep.subr.bf16.mxu0 0
    %77 = vmatpush1.bf16.msra.mxu0 0
    %78 = vmatprep.subr.bf16.mxu0 0
    %79 = vmatpush1.bf16.msra.mxu0 0
    %80 = vmatprep.subr.bf16.mxu0 0
    %81 = vmatpush1.bf16.msra.mxu0 0
    %82 = vmatprep.subr.bf16.mxu0 0
    %83 = vmatpush1.bf16.msra.mxu0 0
    %84 = vmatprep.subr.bf16.mxu0 0
    %85 = vmatpush1.bf16.msra.mxu0 0
    %86 = vmatprep.subr.bf16.mxu0 0
    %87 = vmatpush1.bf16.msra.mxu0 0
    %88 = vmatprep.subr.bf16.mxu0 0
    %89 = vmatpush1.bf16.msra.mxu0 0
    %90 = vmatprep.subr.bf16.mxu0 0
    %91 = vmatpush1.bf16.msra.mxu0 0
    %92 = vmatprep.mubr.bf16.mxu0 0
    %93 = vmatmul.mubr.bf16.gmra.mrb[0].mxu0 %v51
    %v94 = vpop.f32.mrb[0].mxu0
    %v95 = vadd.f32 0.0, %v94
    %v96 = vpop.f32.mrb[0].mxu0
    %v97 = vadd.f32 0.0, %v96
    %v98 = vpop.f32.mrb[0].mxu0
    %v99 = vpop.f32.mrb[0].mxu0
    %100 = vdwg.mxu0
    %v101 = vld [vmem:[%s3] sm:$0xff]
    %v102 = vmul.f32 %v101, %v95
    %103 = vadd.xlane.f32.xlu0 %v102
    %v104 = vpop.xlane.xlu0 %103
    %v105 = vld [vmem:[%s4] sm:$0xff]
    %107 = vrot.lane.b32.xlu0 %v105, 1
    %v108 = vpop.permute.xlu0 %107
    %v110 = vmul.f32 %v97, %v108
    %112 = vrot.lane.b32.xlu0 %v97, 1
    %v113 = vpop.permute.xlu0 %112
    %v115 = vadd.f32 %v110, %v113
    %v116 = vmul.f32 %v104, 2.0
    %v117 = vsub.f32 %v115, %v116
    %v118 = vmax.f32 %v117, 0.0
    %v119 = vrsqrt.pop %v118
    %v120 = vmul.f32 %v118, %v119
    %vm121 = vcmp.eq.f32.partialorder %v118, inf
    %v122 = vsel %vm121, %v118, %v120
    %vm123 = vcmp.eq.f32.partialorder %v118, 0.0
    %v124 = vand.u32 %v118, 2147483648
    %v125 = vsel %vm123, %v124, %v122
    %v126 = vsub.f32 0.1, %v125
    %v127 = vmax.f32 %v126, 0.0
    %v128 = vmul.f32 %v127, %v127
    %v129 = vadd.f32 %v125, %v128
    %131 = vrot.lane.b32.xlu0 %v129, 127
    %v132 = vpop.permute.xlu0 %131
    %vm134 = vcmask 7168
    %v135 = vsel %vm134, %v132, 0.0
    %136 = vadd.xlane.f32.xlu0 %v135
    %v137 = vpop.xlane.xlu0 %136
    %v138 = vrot.slane %v137, 4
    %v139 = vadd.f32 %v137, %v138
    %v140 = vrot.slane %v139, 2
    %v141 = vadd.f32 %v139, %v140
    %v142 = vrot.slane %v141, 1
    %v143 = vadd.f32 %v141, %v142
    %s144 = vtos %v143
    %v145 = vstv %s144
    %146 = vst [vmem:[#allocation2] sm:$0x1] %v145
    // Predicated region
    $region22: #{tpu_custom_call.1} parent=1 // pred_check
      _
    $region23: #{tpu_custom_call.1} parent=1 // pred_check_branch
      %148 = sbr.rel (0) target = $region25
    $region24: #{tpu_custom_call.1} parent=1 // pred_region
      %s150 = ssub.s32 16, 16
      %151 = vsyncadd [#allocation3], %s150
      %s153 = sshll.u32 [#allocation2], 4
      %s154 = int_to_ptr.vmem [resolvable:$true] %s153
      %156 = dma.vmem_to_hbm [thread:$0]  %s154, 16, %s5, [#allocation3]
    $region25: #{tpu_custom_call.1} parent=1 // pred_fallthru
      _
    // Predicated region
    $region26: #{tpu_custom_call.1} parent=1 // pred_check
      _
    $region27: #{tpu_custom_call.1} parent=1 // pred_check_branch
      %158 = sbr.rel (0) target = $region29
    $region28: #{tpu_custom_call.1} parent=1 // pred_region
      %159 = dma.done [#allocation3], 16
    $region29: #{tpu_custom_call.1} parent=1 // pred_fallthru
      _
    %160 = vsyncpa [#allocation3], 1

</llo_original>
